<compile_context>
chip_gen: v6e
topology: v6e:2x2x1
jax: 0.10.0
libtpu: 0.0.40
codegen_flags: <defaults>
</compile_context>

<pallas_src>
import jax
import jax.numpy as jnp
from jax import lax
from jax.experimental import pallas as pl
from jax.experimental.pallas import tpu as pltpu

KSIZE = 7
PAD = KSIZE // 2


def _round_up(v, m):
    return (v + m - 1) // m * m


def _largest_divisor_leq(n, cap):
    cap = max(1, min(n, cap))
    for d in range(cap, 0, -1):
        if n % d == 0:
            return d
    return 1


def _pick_tc(C, cap):
    """Largest divisor of C that is sublane friendly (multiple of 8, or C
    itself) and fits the VMEM-derived cap; falls back to C."""
    best = 0
    for d in range(1, C + 1):
        if C % d == 0 and d <= cap and (d == C or d % 8 == 0):
            best = max(best, d)
    return best if best > 0 else C


def _make_kernel(Nb, TC, CG, H, W, HW, HP_AL, W2_AL, NK):
    n_chunks = TC // CG

    def kernel(band_ref, x_ref, o_ref, sum_ref, max_ref, conv_ref):
        c = pl.program_id(1)
        nc = pl.num_programs(1)

        # --- init running channel sum / max (dense, aligned scratch) -------
        @pl.when(c == 0)
        def _init():
            sum_ref[...] = jnp.zeros(sum_ref.shape, jnp.float32)
            max_ref[...] = jnp.full(max_ref.shape, -jnp.inf, jnp.float32)

        # --- channel reduction: CG channels per step, aligned dense RMW ----
        def _accum(xv):  # xv: (Nb, CG, HW) float32
            sum_ref[...] = sum_ref[...] + jnp.sum(xv, axis=1)
            max_ref[...] = jnp.maximum(max_ref[...], jnp.max(xv, axis=1))

        if n_chunks <= 32:
            for g in range(n_chunks):          # static: few, simple RMW bodies
                _accum(x_ref[:, g * CG:(g + 1) * CG, :].astype(jnp.float32))
        else:
            def body(g, carry):
                start = pl.multiple_of(g * CG, CG)
                _accum(x_ref[:, pl.ds(start, CG), :].astype(jnp.float32))
                return carry
            lax.fori_loop(0, n_chunks, body, 0)

        # --- finalize on the last channel step: banded MXU conv + sigmoid --
        @pl.when(c == nc - 1)
        def _finalize():
            # Padded conv layout: rows [PAD, PAD+H) hold data, cols [0, W) =
            # channel-sum, cols [W, 2W) = channel-max; everything else stays
            # zero (= the conv's zero padding).
            conv_ref[...] = jnp.zeros(conv_ref.shape, jnp.float32)
            conv_ref[:, PAD:PAD + H, 0:W] = sum_ref[...].reshape(Nb, H, W)
            conv_ref[:, PAD:PAD + H, W:2 * W] = max_ref[...].reshape(Nb, H, W)

            # One batched matmul covers all Nb samples (M = Nb*HP_AL) and all
            # 7 vertical taps (packed along the RHS columns).
            lhs = conv_ref[...].reshape(Nb * HP_AL, W2_AL)
            prod = jnp.dot(lhs, band_ref[...],
                           preferred_element_type=jnp.float32)
            p3 = prod.reshape(Nb, HP_AL, NK)

            acc = p3[:, 0:H, 0:W]
            for kh in range(1, KSIZE):
                acc = acc + p3[:, kh:kh + H, kh * W:(kh + 1) * W]

            # Lane-dense output store.
            o_ref[...] = jax.nn.sigmoid(
                acc.reshape(Nb, 1, HW)).astype(o_ref.dtype)

    return kernel


def _build_band(weight, C, W, W2_AL, NK):
    """Packed banded conv-weight matrix, shape (W2_AL, NK) f32.

    Row c in [0, W)  -> avg-channel tap for source column c (1/C folded in).
    Row c in [W, 2W) -> max-channel tap for source column c - W.
    Column kh*W + j  -> vertical tap kh, output column j.
    Out-of-range horizontal taps are simply absent (zero) = zero padding.
    """
    w = weight.reshape(2, KSIZE, KSIZE).astype(jnp.float32)
    w_avg = w[0] / jnp.float32(C)
    w_max = w[1]

    c_idx = jnp.arange(W)[:, None]                  # source column
    j_idx = jnp.arange(W)[None, :]                  # output column
    kw = c_idx - j_idx + PAD                        # (W, W)
    valid = (kw >= 0) & (kw < KSIZE)
    kw_c = jnp.clip(kw, 0, KSIZE - 1)

    band_avg = jnp.where(valid[None], w_avg[:, kw_c], 0.0)   # (K, W, W)
    band_max = jnp.where(valid[None], w_max[:, kw_c], 0.0)   # (K, W, W)
    band = jnp.concatenate([band_avg, band_max], axis=1)     # (K, 2W, W)
    packed = jnp.transpose(band, (1, 0, 2)).reshape(2 * W, KSIZE * W)
    return jnp.pad(packed, ((0, W2_AL - 2 * W), (0, NK - KSIZE * W)))


@jax.jit
def spatial_attention(x, weight):
    """x: (N, C, H, W), weight: (1, 2, K, K) -> (N, 1, H, W)."""
    N, C, H, W = x.shape
    HW = H * W
    HP_AL = _round_up(H + 2 * PAD, 8)      # padded conv rows (sublane aligned)
    W2_AL = _round_up(2 * W, 128)          # conv-plane columns (sum | max)
    NK = _round_up(KSIZE * W, 128)         # packed band columns (7 kh taps)
    itemsize = x.dtype.itemsize

    # --- generation-aware VMEM budget --------------------------------------
    try:
        vmem_cap = int(pltpu.get_tpu_info().vmem_capacity_bytes)
    except Exception:  # pragma: no cover - conservative (v7x-safe) default
        vmem_cap = 64 * 2 ** 20
    budget = max(16 * 2 ** 20, vmem_cap // 2)

    # --- batch tile: keep the parallel grid axis >= 2 (v7x has 2 cores) ----
    Nb = _largest_divisor_leq(N, min(8, max(1, N // 2)))

    # --- channel tile: as large as the budget allows (fewer grid steps) ----
    band_bytes = W2_AL * NK * 4
    out_bytes = Nb * HW * itemsize
    scratch_bytes = (2 * Nb * HW + Nb * HP_AL * W2_AL) * 4
    fixed = 2 * band_bytes + 2 * out_bytes + scratch_bytes + (2 << 20)
    avail = max(1 << 20, budget - fixed)
    tc_cap = max(1, avail // (2 * Nb * HW * itemsize))   # double-buffered input
    TC = _pick_tc(C, tc_cap)

    # Channels reduced per inner step: sublane-dense, bounded vreg footprint.
    cg_cap = min(8, max(1, 32768 // max(1, Nb * HW)))
    CG = _largest_divisor_leq(TC, cg_cap)

    est = 2 * Nb * TC * HW * itemsize + fixed
    vmem_limit = int(min(vmem_cap * 0.9, max(32 * 2 ** 20, est * 3 // 2)))

    band = _build_band(weight, C, W, W2_AL, NK)
    x3 = x.reshape(N, C, HW)               # lane-dense streaming layout (free)

    out = pl.pallas_call(
        _make_kernel(Nb, TC, CG, H, W, HW, HP_AL, W2_AL, NK),
        out_shape=jax.ShapeDtypeStruct((N, 1, HW), x.dtype),
        grid_spec=pltpu.PrefetchScalarGridSpec(
            num_scalar_prefetch=0,
            grid=(N // Nb, C // TC),
            in_specs=[
                # Packed conv band: constant block index -> stays resident
                # (Pallas skips the re-DMA for an unchanged block).
                pl.BlockSpec((W2_AL, NK), lambda n, c: (0, 0)),
                # Streamed lane-dense input slab.
                pl.BlockSpec((Nb, TC, HW), lambda n, c: (n, c, 0)),
            ],
            out_specs=pl.BlockSpec((Nb, 1, HW), lambda n, c: (n, 0, 0)),
            scratch_shapes=[
                pltpu.VMEM((Nb, HW), jnp.float32),             # running sum
                pltpu.VMEM((Nb, HW), jnp.float32),             # running max
                pltpu.VMEM((Nb, HP_AL, W2_AL), jnp.float32),   # padded plane
            ],
        ),
        compiler_params=pltpu.CompilerParams(
            dimension_semantics=("parallel", "arbitrary"),
            vmem_limit_bytes=vmem_limit),
    )(band, x3)

    return out.reshape(N, 1, H, W)


def spatial_attention_ref(x, weight):
    """Pure-JAX reference matching the PyTorch forward."""
    avg = jnp.mean(x, axis=1, keepdims=True)
    mx = jnp.max(x, axis=1, keepdims=True)
    cat = jnp.concatenate([avg, mx], axis=1)                  # (N, 2, H, W)
    y = lax.conv_general_dilated(
        cat, weight, window_strides=(1, 1),
        padding=[(PAD, PAD), (PAD, PAD)],
        dimension_numbers=("NCHW", "OIHW", "NCHW"),
        precision=lax.Precision.HIGHEST)
    return jax.nn.sigmoid(y)


if __name__ == "__main__":
    key = jax.random.PRNGKey(0)
    kx, kw_key = jax.random.split(key)

    N, C, H, W = 2, 4, 16, 16
    x = jax.random.normal(kx, (N, C, H, W), dtype=jnp.float32)

    # Deterministic Conv2d(2, 1, 7, bias=False) weight (PyTorch-like uniform).
    fan_in = 2 * KSIZE * KSIZE
    bound = 1.0 / jnp.sqrt(jnp.float32(fan_in))
    weight = jax.random.uniform(kw_key, (1, 2, KSIZE, KSIZE),
                                minval=-bound, maxval=bound, dtype=jnp.float32)

    out = spatial_attention(x, weight)
    out = jax.block_until_ready(out)

    ref = spatial_attention_ref(x, weight)
    assert out.shape == (N, 1, H, W)
    # Tolerance leaves headroom for the MXU's f32 decomposition vs XLA's conv.
    assert jnp.allclose(out, ref, atol=2e-4, rtol=1e-4), (
        float(jnp.max(jnp.abs(out - ref))))

    print("KERNEL_OK")
</pallas_src>

<mosaic_0001>
module attributes {stable_mosaic.version = 11 : i64} {
  func.func @kernel(%arg0: i32, %arg1: i32, %arg2: memref<128x128xf32, #tpu.memory_space<vmem>>, %arg3: memref<1x4x256xf32, #tpu.memory_space<vmem>>, %arg4: memref<1x1x256xf32, #tpu.memory_space<vmem>>, %arg5: memref<1x256xf32, #tpu.memory_space<vmem>>, %arg6: memref<1x256xf32, #tpu.memory_space<vmem>>, %arg7: memref<1x24x128xf32, #tpu.memory_space<vmem>>) attributes {dimension_semantics = [#tpu.dimension_semantics<parallel>, #tpu.dimension_semantics<arbitrary>], iteration_bounds = array<i64: 2, 1>, scalar_prefetch = 0 : i64, scratch_operands = 3 : i64, tpu.core_type = #tpu.core_type<tc>, window_params = [{pipeline_mode = #tpu.pipeline_mode<synchronous>, transform_indices = @transform_0, window_bounds = array<i64: 128, 128>}, {transform_indices = @transform_1, window_bounds = array<i64: 1, 4, 256>}, {transform_indices = @transform_2, window_bounds = array<i64: 1, 1, 256>}]} {
    %c0_i32 = arith.constant 0 : i32
    %0 = arith.cmpi eq, %arg1, %c0_i32 : i32
    %1 = arith.extui %0 : i1 to i32
    %c0_i32_0 = arith.constant 0 : i32
    %2 = arith.cmpi ne, %1, %c0_i32_0 : i32
    scf.if %2 {
      %cst_14 = arith.constant 0.000000e+00 : f32
      %15 = vector.broadcast %cst_14 : f32 to vector<1x256xf32>
      %c0_15 = arith.constant 0 : index
      %c0_16 = arith.constant 0 : index
      %16 = vector.load %arg5[%c0_15, %c0_16] : memref<1x256xf32, #tpu.memory_space<vmem>>, vector<1x256xf32>
      tpu.vector_store %arg5[%c0_15, %c0_16], %15 {strides = array<i32>} : memref<1x256xf32, #tpu.memory_space<vmem>>, vector<1x256xf32>,
      %cst_17 = arith.constant 0xFF800000 : f32
      %17 = vector.broadcast %cst_17 : f32 to vector<1x256xf32>
      %c0_18 = arith.constant 0 : index
      %c0_19 = arith.constant 0 : index
      %18 = vector.load %arg6[%c0_18, %c0_19] : memref<1x256xf32, #tpu.memory_space<vmem>>, vector<1x256xf32>
      tpu.vector_store %arg6[%c0_18, %c0_19], %17 {strides = array<i32>} : memref<1x256xf32, #tpu.memory_space<vmem>>, vector<1x256xf32>,
    } else {
    }
    %c0 = arith.constant 0 : index
    %c0_1 = arith.constant 0 : index
    %c0_2 = arith.constant 0 : index
    %3 = vector.load %arg3[%c0, %c0_1, %c0_2] : memref<1x4x256xf32, #tpu.memory_space<vmem>>, vector<1x4x256xf32>
    %c0_3 = arith.constant 0 : index
    %c0_4 = arith.constant 0 : index
    %4 = vector.load %arg5[%c0_3, %c0_4] : memref<1x256xf32, #tpu.memory_space<vmem>>, vector<1x256xf32>
    %cst = arith.constant dense<0.000000e+00> : vector<1x256xf32>
    %5 = vector.multi_reduction <add>, %3, %cst [1] : vector<1x4x256xf32> to vector<1x256xf32>
    %6 = arith.addf %4, %5 : vector<1x256xf32>
    %c0_5 = arith.constant 0 : index
    %c0_6 = arith.constant 0 : index
    %7 = vector.load %arg5[%c0_5, %c0_6] : memref<1x256xf32, #tpu.memory_space<vmem>>, vector<1x256xf32>
    tpu.vector_store %arg5[%c0_5, %c0_6], %6 {strides = array<i32>} : memref<1x256xf32, #tpu.memory_space<vmem>>, vector<1x256xf32>,
    %c0_7 = arith.constant 0 : index
    %c0_8 = arith.constant 0 : index
    %8 = vector.load %arg6[%c0_7, %c0_8] : memref<1x256xf32, #tpu.memory_space<vmem>>, vector<1x256xf32>
    %cst_9 = arith.constant dense<0xFF800000> : vector<1x256xf32>
    %9 = vector.multi_reduction <maximumf>, %3, %cst_9 [1] : vector<1x4x256xf32> to vector<1x256xf32>
    %10 = arith.maximumf %8, %9 : vector<1x256xf32>
    %c0_10 = arith.constant 0 : index
    %c0_11 = arith.constant 0 : index
    %11 = vector.load %arg6[%c0_10, %c0_11] : memref<1x256xf32, #tpu.memory_space<vmem>>, vector<1x256xf32>
    tpu.vector_store %arg6[%c0_10, %c0_11], %10 {strides = array<i32>} : memref<1x256xf32, #tpu.memory_space<vmem>>, vector<1x256xf32>,
    %c0_i32_12 = arith.constant 0 : i32
    %12 = arith.cmpi eq, %arg1, %c0_i32_12 : i32
    %13 = arith.extui %12 : i1 to i32
    %c0_i32_13 = arith.constant 0 : i32
    %14 = arith.cmpi ne, %13, %c0_i32_13 : i32
    scf.if %14 {
      %cst_14 = arith.constant 0.000000e+00 : f32
      %15 = vector.broadcast %cst_14 : f32 to vector<1x24x128xf32>
      %c0_15 = arith.constant 0 : index
      %c0_16 = arith.constant 0 : index
      %c0_17 = arith.constant 0 : index
      %16 = vector.load %arg7[%c0_15, %c0_16, %c0_17] : memref<1x24x128xf32, #tpu.memory_space<vmem>>, vector<1x24x128xf32>
      tpu.vector_store %arg7[%c0_15, %c0_16, %c0_17], %15 {strides = array<i32>} : memref<1x24x128xf32, #tpu.memory_space<vmem>>, vector<1x24x128xf32>,
      %c0_18 = arith.constant 0 : index
      %c0_19 = arith.constant 0 : index
      %17 = vector.load %arg5[%c0_18, %c0_19] : memref<1x256xf32, #tpu.memory_space<vmem>>, vector<1x256xf32>
      %18 = vector.shape_cast %17 : vector<1x256xf32> to vector<1x16x16xf32>
      %c0_20 = arith.constant 0 : index
      %c3 = arith.constant 3 : index
      %c0_21 = arith.constant 0 : index
      %19 = vector.load %arg7[%c0_20, %c3, %c0_21] : memref<1x24x128xf32, #tpu.memory_space<vmem>>, vector<1x16x16xf32>
      tpu.vector_store %arg7[%c0_20, %c3, %c0_21], %18 {strides = array<i32>} : memref<1x24x128xf32, #tpu.memory_space<vmem>>, vector<1x16x16xf32>,
      %c0_22 = arith.constant 0 : index
      %c0_23 = arith.constant 0 : index
      %20 = vector.load %arg6[%c0_22, %c0_23] : memref<1x256xf32, #tpu.memory_space<vmem>>, vector<1x256xf32>
      %21 = vector.shape_cast %20 : vector<1x256xf32> to vector<1x16x16xf32>
      %c0_24 = arith.constant 0 : index
      %c3_25 = arith.constant 3 : index
      %c16 = arith.constant 16 : index
      %22 = vector.load %arg7[%c0_24, %c3_25, %c16] : memref<1x24x128xf32, #tpu.memory_space<vmem>>, vector<1x16x16xf32>
      tpu.vector_store %arg7[%c0_24, %c3_25, %c16], %21 {strides = array<i32>} : memref<1x24x128xf32, #tpu.memory_space<vmem>>, vector<1x16x16xf32>,
      %c0_26 = arith.constant 0 : index
      %c0_27 = arith.constant 0 : index
      %c0_28 = arith.constant 0 : index
      %23 = vector.load %arg7[%c0_26, %c0_27, %c0_28] : memref<1x24x128xf32, #tpu.memory_space<vmem>>, vector<1x24x128xf32>
      %24 = vector.shape_cast %23 : vector<1x24x128xf32> to vector<24x128xf32>
      %c0_29 = arith.constant 0 : index
      %c0_30 = arith.constant 0 : index
      %25 = vector.load %arg2[%c0_29, %c0_30] : memref<128x128xf32, #tpu.memory_space<vmem>>, vector<128x128xf32>
      %cst_31 = arith.constant dense<0.000000e+00> : vector<24x128xf32>
      %26 = tpu.matmul %24, %25, %cst_31 {dimension_numbers = #tpu.dot_dimension_numbers<[1], [0], [0], [1], [0, 0, 1, 1], [], []>} : vector<24x128xf32>, vector<128x128xf32>, vector<24x128xf32> -> vector<24x128xf32>
      %27 = vector.shape_cast %26 : vector<24x128xf32> to vector<1x24x128xf32>
      %28 = vector.extract_strided_slice %27 {offsets = [0, 0, 0], sizes = [1, 16, 16], strides = [1, 1, 1]} : vector<1x24x128xf32> to vector<1x16x16xf32>
      %29 = vector.extract_strided_slice %27 {offsets = [0, 1, 16], sizes = [1, 16, 16], strides = [1, 1, 1]} : vector<1x24x128xf32> to vector<1x16x16xf32>
      %30 = arith.addf %28, %29 : vector<1x16x16xf32>
      %31 = vector.extract_strided_slice %27 {offsets = [0, 2, 32], sizes = [1, 16, 16], strides = [1, 1, 1]} : vector<1x24x128xf32> to vector<1x16x16xf32>
      %32 = arith.addf %30, %31 : vector<1x16x16xf32>
      %33 = vector.extract_strided_slice %27 {offsets = [0, 3, 48], sizes = [1, 16, 16], strides = [1, 1, 1]} : vector<1x24x128xf32> to vector<1x16x16xf32>
      %34 = arith.addf %32, %33 : vector<1x16x16xf32>
      %35 = vector.extract_strided_slice %27 {offsets = [0, 4, 64], sizes = [1, 16, 16], strides = [1, 1, 1]} : vector<1x24x128xf32> to vector<1x16x16xf32>
      %36 = arith.addf %34, %35 : vector<1x16x16xf32>
      %37 = vector.extract_strided_slice %27 {offsets = [0, 5, 80], sizes = [1, 16, 16], strides = [1, 1, 1]} : vector<1x24x128xf32> to vector<1x16x16xf32>
      %38 = arith.addf %36, %37 : vector<1x16x16xf32>
      %39 = vector.extract_strided_slice %27 {offsets = [0, 6, 96], sizes = [1, 16, 16], strides = [1, 1, 1]} : vector<1x24x128xf32> to vector<1x16x16xf32>
      %40 = arith.addf %38, %39 : vector<1x16x16xf32>
      %41 = vector.shape_cast %40 : vector<1x16x16xf32> to vector<1x1x256xf32>
      %42 = arith.negf %41 : vector<1x1x256xf32>
      %43 = math.exp %42 : vector<1x1x256xf32>
      %cst_32 = arith.constant 1.000000e+00 : f32
      %44 = vector.broadcast %cst_32 : f32 to vector<1x1x256xf32>
      %45 = arith.addf %44, %43 : vector<1x1x256xf32>
      %46 = arith.divf %44, %45 : vector<1x1x256xf32>
      %c0_33 = arith.constant 0 : index
      %c0_34 = arith.constant 0 : index
      %c0_35 = arith.constant 0 : index
      %47 = vector.load %arg4[%c0_33, %c0_34, %c0_35] : memref<1x1x256xf32, #tpu.memory_space<vmem>>, vector<1x1x256xf32>
      tpu.vector_store %arg4[%c0_33, %c0_34, %c0_35], %46 {strides = array<i32>} : memref<1x1x256xf32, #tpu.memory_space<vmem>>, vector<1x1x256xf32>,
    } else {
    }
    return
  }
  func.func @transform_0(%arg0: i32, %arg1: i32) -> (i32, i32) {
    %c0_i32 = arith.constant 0 : i32
    %c0_i32_0 = arith.constant 0 : i32
    %c0_i32_1 = arith.constant 0 : i32
    return %c0_i32, %c0_i32_0 : i32, i32
  }
  func.func @transform_1(%arg0: i32, %arg1: i32) -> (i32, i32, i32) {
    %c0_i32 = arith.constant 0 : i32
    %c0_i32_0 = arith.constant 0 : i32
    return %arg0, %arg1, %c0_i32 : i32, i32, i32
  }
  func.func @transform_2(%arg0: i32, %arg1: i32) -> (i32, i32, i32) {
    %c0_i32 = arith.constant 0 : i32
    %c0_i32_0 = arith.constant 0 : i32
    %c0_i32_1 = arith.constant 0 : i32
    return %arg0, %c0_i32, %c0_i32_0 : i32, i32, i32
  }
}

</mosaic_0001>

<llo_original>
// kernel: spatial_attention.1
$region0: #{spatial_attention.1}
  #allocation0 [shape = 'u32[]', space=smem, size = 0x4, offset = 0x4, fixed_abs, tag = 'smem constant byte address 0x4 - core index']
  #allocation1 [shape = 'u32[144,128]{1,0:T(1,128)}', space=vmem, size = 0x12000, scoped, tag = 'internal scratch']
  #allocation2 [shape = 'f32[1,256]{1,0:T(1,128)}', space=vmem, size = 0x400, scoped, tag = 'scratch operand']
  #allocation3 [shape = 'f32[1,256]{1,0:T(1,128)}', space=vmem, size = 0x400, scoped, tag = 'scratch operand']
  #allocation4 [shape = 'f32[1,24,128]{2,1,0:T(8,128)}', space=vmem, size = 0x3000, scoped, tag = 'scratch operand']
  %s0 = inlined_call_operand.vmem [shape: f32[128,128], index: 0, kind: input, shape index: {}]
  %s1 = inlined_call_operand.vmem [shape: f32[2,4,256], index: 1, kind: input, shape index: {}]
  %s2 = inlined_call_operand.vmem [shape: f32[2,1,256], index: 2, kind: output, shape index: {}]
  %s3 = sld [smem:[#allocation0]]
  $region49: #{spatial_attention.1} parent=0
    _
  %s5 = ssub.s32 1, %s3
  %s6 = scalar_select 0, %s5, %s3
  loop: start=0, step=1, limit=4
  $region2: #{spatial_attention.1} parent=0 // loop_pre_header
    _
  $region3: #{spatial_attention.1} parent=0 // loop_header
    %s8 = sphi 0, %s12
    %p9 = scmp.ge.s32.totalorder %s8, 4
    %s15 = sphi 0, %s27
    %s16 = sphi 0, %s23
    %s17 = sphi 0, %s15
    %s18 = sphi 0, %s16
    %s19 = sphi 0, %s17
    %s20 = sphi 0, %s18
    %s28 = sphi 0, %s28
    %s30 = sphi 0, %s28
    %s31 = sphi 0, %s30
    %s45 = sphi 0, %s31
    %s53 = sphi 0, %s55
    %s56 = sphi 0, %s53
    %s57 = sphi 0, %s56
    %s73 = sphi 0, %s57
    %s79 = sphi 0, %s81
    %s82 = sphi 0, %s79
    %s83 = sphi 0, %s82
    %s99 = sphi 0, %s83
  $region4: #{spatial_attention.1} parent=0 // loop_header_branch
    %11 = sbr.rel (%p9) target = $region8
  $region5: #{spatial_attention.1} parent=0 // loop_body
    %s13 = ssub.s32 %s8, 1
    %s14 = ssub.s32 %s8, 2
    %s21 = sadd.s32 1, %s16
    %p22 = scmp.ge.s32.totalorder %s21, 1
    %s23 = scalar_select %p22, 0, %s21
    %s24 = sadd.s32 1, %s15
    %s25 = scalar_select %p22, %s24, %s15
    %p26 = scmp.ge.s32.totalorder %s25, 2
    %s27 = scalar_select %p26, 0, %s25
    %s29 = sadd.s32 %s28, 1
    %p32 = scmp.eq.s32.totalorder %s8, 1
    %p33 = scmp.ne.s32.totalorder %s28, %s30
    %p34 = scmp.eq.s32.totalorder %s8, 0
    %p35 = por %p33, %p34
    %p36 = scmp.ne.s32.totalorder %s28, %s30
    %p37 = scmp.eq.s32.totalorder %s13, 1
    %p38 = por %p36, %p37
    %p39 = scmp.ne.s32.totalorder %s30, %s31
    %p40 = scmp.eq.s32.totalorder %s13, 0
    %p41 = por %p39, %p40
    %p42 = scmp.ne.s32.totalorder %s30, %s31
    %p43 = scmp.eq.s32.totalorder %s14, 1
    %p44 = por %p42, %p43
    %p46 = scmp.ne.s32.totalorder %s31, %s45
    %p47 = scmp.eq.s32.totalorder %s14, 0
    %p48 = por %p46, %p47
    %s49 = ssub.s32 %s15, %s27
    %s50 = ssub.s32 %s16, %s23
    %s51 = sor.u32 %s49, %s50
    %p52 = scmp.eq.s32.totalorder %s51, 0
    %s54 = sadd.s32 %s53, 1
    %s55 = scalar_select %p52, %s53, %s54
    %p58 = pneg %p52
    %p59 = scmp.eq.s32.totalorder %s8, 1
    %p60 = por %p58, %p59
    %p61 = scmp.ne.s32.totalorder %s53, %s56
    %p62 = scmp.eq.s32.totalorder %s8, 0
    %p63 = por %p61, %p62
    %p64 = scmp.ne.s32.totalorder %s53, %s56
    %p65 = scmp.eq.s32.totalorder %s13, 1
    %p66 = por %p64, %p65
    %p67 = scmp.ne.s32.totalorder %s56, %s57
    %p68 = scmp.eq.s32.totalorder %s13, 0
    %p69 = por %p67, %p68
    %p70 = scmp.ne.s32.totalorder %s56, %s57
    %p71 = scmp.eq.s32.totalorder %s14, 1
    %p72 = por %p70, %p71
    %p74 = scmp.ne.s32.totalorder %s57, %s73
    %p75 = scmp.eq.s32.totalorder %s14, 0
    %p76 = por %p74, %p75
    %s77 = ssub.s32 %s15, %s27
    %p78 = scmp.eq.s32.totalorder %s77, 0
    %s80 = sadd.s32 %s79, 1
    %s81 = scalar_select %p78, %s79, %s80
    %p84 = pneg %p78
    %p85 = scmp.eq.s32.totalorder %s8, 1
    %p86 = por %p84, %p85
    %p87 = scmp.ne.s32.totalorder %s79, %s82
    %p88 = scmp.eq.s32.totalorder %s8, 0
    %p89 = por %p87, %p88
    %p90 = scmp.ne.s32.totalorder %s79, %s82
    %p91 = scmp.eq.s32.totalorder %s13, 1
    %p92 = por %p90, %p91
    %p93 = scmp.ne.s32.totalorder %s82, %s83
    %p94 = scmp.eq.s32.totalorder %s13, 0
    %p95 = por %p93, %p94
    %p96 = scmp.ne.s32.totalorder %s82, %s83
    %p97 = scmp.eq.s32.totalorder %s14, 1
    %p98 = por %p96, %p97
    %p100 = scmp.ne.s32.totalorder %s83, %s99
    %p101 = scmp.eq.s32.totalorder %s14, 0
    %p102 = por %p100, %p101
    %p103 = scmp.le.s32.totalorder 1, %s8
    %p104 = scmp.lt.s32.totalorder %s8, 3
    %p105 = pnand %p103, %p104
    %p106 = pneg %p105
    // Predicated region
    $region9: #{spatial_attention.1} parent=5 // pred_check
      _
    $region10: #{spatial_attention.1} parent=5 // pred_check_branch
      %108 = sbr.rel (%p105) target = $region12
    $region11: #{spatial_attention.1} parent=5 // pred_region
      %s109 = ssub.s32 %s8, 1
      // Predicated region
      $region13: #{spatial_attention.1} parent=11 // pred_check
        %p110 = pneg %p41
      $region14: #{spatial_attention.1} parent=11 // pred_check_branch
        %112 = sbr.rel (%p110) target = $region16
      $region15: #{spatial_attention.1} parent=11 // pred_region
        _
      $region16: #{spatial_attention.1} parent=11 // pred_fallthru
        _
    $region12: #{spatial_attention.1} parent=5 // pred_fallthru
      _
    %p113 = scmp.lt.s32.totalorder %s8, 2
    // Predicated region
    $region17: #{spatial_attention.1} parent=5 // pred_check
      %p114 = pneg %p113
    $region18: #{spatial_attention.1} parent=5 // pred_check_branch
      %116 = sbr.rel (%p114) target = $region20
    $region19: #{spatial_attention.1} parent=5 // pred_region
      // Predicated region
      $region21: #{spatial_attention.1} parent=19 // pred_check
        %p117 = pneg %p63
      $region22: #{spatial_attention.1} parent=19 // pred_check_branch
        %119 = sbr.rel (%p117) target = $region24
      $region23: #{spatial_attention.1} parent=19 // pred_region
        %p120 = scmp.lt.s32.totalorder %s15, 1
        %s121 = scalar_select %p120, %s15, 1
        %p122 = scmp.lt.s32.totalorder %s16, 0
        %s123 = scalar_select %p122, %s16, 0
        %s124 = smul.addr %s123, 2
        %s125 = smul.addr %s121, 2
        %s126 = sadd.s32 %s124, %s125
        %s127 = smul.addr %s126, 4
        %s128 = scalar_lea.vmem %s1, %s127
      $region24: #{spatial_attention.1} parent=19 // pred_fallthru
        _
    $region20: #{spatial_attention.1} parent=5 // pred_fallthru
      _
    %p129 = scmp.le.s32.totalorder 1, %s8
    %p130 = scmp.lt.s32.totalorder %s8, 3
    %p131 = pnand %p129, %p130
    %p132 = pneg %p131
    // Predicated region
    $region25: #{spatial_attention.1} parent=5 // pred_check
      _
    $region26: #{spatial_attention.1} parent=5 // pred_check_branch
      %134 = sbr.rel (%p131) target = $region28
    $region27: #{spatial_attention.1} parent=5 // pred_region
      %s135 = ssub.s32 %s8, 1
      %p136 = pneg %p41
      %p137 = pneg %p38
      %p138 = scmp.lt.s32.totalorder %s17, 1
      %s139 = scalar_select %p138, %s17, 1
      %p140 = scmp.lt.s32.totalorder %s18, 0
      %s141 = scalar_select %p140, %s18, 0
      %s142 = smul.addr %s141, 2
      %s143 = smul.addr %s139, 2
      %s144 = sadd.s32 %s142, %s143
      %s145 = smul.addr %s144, 4
      %s146 = scalar_lea.vmem %s1, %s145
      %p147 = pneg %p69
      %p148 = pneg %p66
      %p149 = pneg %p95
      %p150 = pneg %p92
      %p151 = scmp.lt.s32.totalorder %s17, 1
      %s152 = scalar_select %p151, %s17, 1
      %s153 = smul.addr %s152, 2
      %s154 = scalar_lea.vmem %s2, %s153
      %p155 = scmp.lt.s32.totalorder %s17, 1
      %s156 = scalar_select %p155, %s17, 1
      %p157 = scmp.lt.s32.totalorder %s18, 0
      %s158 = scalar_select %p157, %s18, 0
      %s159 = smul.addr %s158, 2
      %s160 = smul.addr %s156, 2
      %s161 = sadd.s32 %s159, %s160
      %s162 = smul.addr %s161, 4
      %s163 = scalar_lea.vmem %s1, %s162
      %p164 = scmp.lt.s32.totalorder %s17, 1
      %s165 = scalar_select %p164, %s17, 1
      %s166 = smul.addr %s165, 2
      %s167 = scalar_lea.vmem %s2, %s166
      %p168 = scmp.eq.s32.totalorder %s18, 0
      // Predicated region
      $region29: #{spatial_attention.1} parent=27 // pred_check
        %p169 = pneg %p168
      $region30: #{spatial_attention.1} parent=27 // pred_check_branch
        %171 = sbr.rel (%p169) target = $region32
      $region31: #{spatial_attention.1} parent=27 // pred_region
        %v172 = vlaneseq
        %vm173 = vcmp.ge.s32.totalorder %v172, 0
        %vm174 = vcmp.lt.s32.totalorder %v172, 256
        %vm175 = vmand %vm173, %vm174
        %176 = vst.msk [vmem:[#allocation2] sm:$0x3] %vm175, 0.0
        %177 = vst.msk [vmem:[#allocation3] sm:$0x3] %vm175, -inf
      $region32: #{spatial_attention.1} parent=27 // pred_fallthru
        _
      %v178 = vld [vmem:[%s163] sm:$0xff]
      %v179 = vld [vmem:[#allocation2] sm:$0x3]
      %v181 = vcombine.high %v178, %v178
      %vm183 = vcmask 1043456
      %v184 = vsel %vm183, %v178, 0.0
      %v185 = vrot.slane %v184, 4
      %v186 = vadd.f32 %v184, %v185
      %v187 = vrot.slane %v186, 2
      %v188 = vadd.f32 %v186, %v187
      %v189 = vrot.slane %v188, 1
      %v190 = vadd.f32 %v188, %v189
      %v191 = vsel %vm183, %v181, 0.0
      %v192 = vrot.slane %v191, 4
      %v193 = vadd.f32 %v191, %v192
      %v194 = vrot.slane %v193, 2
      %v195 = vadd.f32 %v193, %v194
      %v196 = vrot.slane %v195, 1
      %v197 = vadd.f32 %v195, %v196
      %v200 = vcombine.low %v190, %v197
      %v202 = vunpack.c.l.s4 1966171168
      %v203 = vunpack.c.0.s8 %v202
      %v204 = vlaneseq
      %v205 = vshrl.u32 %v204, 7
      %v206 = vsub.s32 %v203, %v205
      %v207 = vrot.slane %v200, %v206
      %v209 = vunpack.c.l.s4 1966171168
      %v210 = vunpack.c.0.s8 %v209
      %v211 = vlaneseq
      %v212 = vshrl.u32 %v211, 7
      %v213 = vsub.s32 %v210, %v212
      %v214 = vrot.slane %v207, %v213
      %v216 = vadd.f32 %v179, %v214
      %v217 = vlaneseq
      %vm218 = vcmp.ge.s32.totalorder %v217, 0
      %vm219 = vcmp.lt.s32.totalorder %v217, 256
      %vm220 = vmand %vm218, %vm219
      %221 = vst.msk [vmem:[#allocation2] sm:$0x3] %vm220, %v216
      %v222 = vld [vmem:[#allocation3] sm:$0x3]
      %v223 = vsel %vm183, %v178, -inf
      %v224 = vrot.slane %v223, 4
      %v225 = vmax.f32 %v223, %v224
      %v226 = vrot.slane %v225, 2
      %v227 = vmax.f32 %v225, %v226
      %v228 = vrot.slane %v227, 1
      %v229 = vmax.f32 %v227, %v228
      %v230 = vsel %vm183, %v181, -inf
      %v231 = vrot.slane %v230, 4
      %v232 = vmax.f32 %v230, %v231
      %v233 = vrot.slane %v232, 2
      %v234 = vmax.f32 %v232, %v233
      %v235 = vrot.slane %v234, 1
      %v236 = vmax.f32 %v234, %v235
      %v239 = vcombine.low %v229, %v236
      %v241 = vunpack.c.l.s4 1966171168
      %v242 = vunpack.c.0.s8 %v241
      %v243 = vlaneseq
      %v244 = vshrl.u32 %v243, 7
      %v245 = vsub.s32 %v242, %v244
      %v246 = vrot.slane %v239, %v245
      %v248 = vunpack.c.l.s4 1966171168
      %v249 = vunpack.c.0.s8 %v248
      %v250 = vlaneseq
      %v251 = vshrl.u32 %v250, 7
      %v252 = vsub.s32 %v249, %v251
      %v253 = vrot.slane %v246, %v252
      %v255 = vmax.f32 %v222, %v253
      %256 = vst.msk [vmem:[#allocation3] sm:$0x3] %vm220, %v255
      // Predicated region
      $region33: #{spatial_attention.1} parent=27 // pred_check
        %p257 = pneg %p168
      $region34: #{spatial_attention.1} parent=27 // pred_check_branch
        %259 = sbr.rel (%p257) target = $region36
      $region35: #{spatial_attention.1} parent=27 // pred_region
        %260 = vst [vmem:[#allocation4] sm:$0xff] 0.0
        %261 = vst [vmem:[#allocation4 + $0x8] sm:$0xff] 0.0
        %262 = vst [vmem:[#allocation4 + $0x10] sm:$0xff] 0.0
        %v263 = vld [vmem:[#allocation2] sm:$0x3]
        %v265 = vrot.slane %v263, 1
        %266 = vrot.lane.b32.xlu0 %v263, 112
        %v267 = vpop.permute.xlu0 %266
        %v268 = vrot.slane %v267, 1
        %269 = vrot.lane.b32.xlu0 %v263, 96
        %v270 = vpop.permute.xlu0 %269
        %v271 = vrot.slane %v270, 1
        %272 = vrot.lane.b32.xlu0 %v263, 80
        %v273 = vpop.permute.xlu0 %272
        %v274 = vrot.slane %v273, 1
        %275 = vrot.lane.b32.xlu0 %v263, 64
        %v276 = vpop.permute.xlu0 %275
        %v277 = vrot.slane %v276, 1
        %278 = vrot.lane.b32.xlu0 %v263, 48
        %v279 = vpop.permute.xlu0 %278
        %v280 = vrot.slane %v279, 1
        %281 = vrot.lane.b32.xlu0 %v263, 32
        %v282 = vpop.permute.xlu0 %281
        %v283 = vrot.slane %v282, 1
        %284 = vrot.lane.b32.xlu0 %v263, 16
        %v285 = vpop.permute.xlu0 %284
        %v286 = vrot.slane %v285, 1
        %v287 = vcombine.low %v263, %v267
        %v288 = vcombine.low %v270, %v273
        %v289 = vcombine.low %v276, %v279
        %v290 = vcombine.low %v282, %v285
        %v292 = vunpack.c.l.s4 1966171168
        %v293 = vunpack.c.0.s8 %v292
        %v294 = vlaneseq
        %v295 = vshrl.u32 %v294, 7
        %v296 = vsub.s32 %v293, %v295
        %v297 = vrot.slane %v287, %v296
        %v299 = vunpack.c.l.s4 1966171168
        %v300 = vunpack.c.0.s8 %v299
        %v301 = vlaneseq
        %v302 = vshrl.u32 %v301, 7
        %v303 = vsub.s32 %v300, %v302
        %v304 = vrot.slane %v288, %v303
        %v306 = vunpack.c.l.s4 1966171168
        %v307 = vunpack.c.0.s8 %v306
        %v308 = vlaneseq
        %v309 = vshrl.u32 %v308, 7
        %v310 = vsub.s32 %v307, %v309
        %v311 = vrot.slane %v289, %v310
        %v313 = vunpack.c.l.s4 1966171168
        %v314 = vunpack.c.0.s8 %v313
        %v315 = vlaneseq
        %v316 = vshrl.u32 %v315, 7
        %v317 = vsub.s32 %v314, %v316
        %v318 = vrot.slane %v290, %v317
        %v319 = vcombine.low %v297, %v304
        %v320 = vcombine.low %v311, %v318
        %v322 = vunpack.c.l.s4 1966171168
        %v323 = vunpack.c.0.s8 %v322
        %v324 = vlaneseq
        %v325 = vshrl.u32 %v324, 7
        %v326 = vsub.s32 %v323, %v325
        %v327 = vrot.slane %v319, %v326
        %v329 = vunpack.c.l.s4 1966171168
        %v330 = vunpack.c.0.s8 %v329
        %v331 = vlaneseq
        %v332 = vshrl.u32 %v331, 7
        %v333 = vsub.s32 %v330, %v332
        %v334 = vrot.slane %v320, %v333
        %v335 = vcombine.low %v327, %v334
        %v336 = vcombine.low %v265, %v268
        %v337 = vcombine.low %v271, %v274
        %v338 = vcombine.low %v277, %v280
        %v339 = vcombine.low %v283, %v286
        %v341 = vunpack.c.l.s4 1966171168
        %v342 = vunpack.c.0.s8 %v341
        %v343 = vlaneseq
        %v344 = vshrl.u32 %v343, 7
        %v345 = vsub.s32 %v342, %v344
        %v346 = vrot.slane %v336, %v345
        %v348 = vunpack.c.l.s4 1966171168
        %v349 = vunpack.c.0.s8 %v348
        %v350 = vlaneseq
        %v351 = vshrl.u32 %v350, 7
        %v352 = vsub.s32 %v349, %v351
        %v353 = vrot.slane %v337, %v352
        %v355 = vunpack.c.l.s4 1966171168
        %v356 = vunpack.c.0.s8 %v355
        %v357 = vlaneseq
        %v358 = vshrl.u32 %v357, 7
        %v359 = vsub.s32 %v356, %v358
        %v360 = vrot.slane %v338, %v359
        %v362 = vunpack.c.l.s4 1966171168
        %v363 = vunpack.c.0.s8 %v362
        %v364 = vlaneseq
        %v365 = vshrl.u32 %v364, 7
        %v366 = vsub.s32 %v363, %v365
        %v367 = vrot.slane %v339, %v366
        %v368 = vcombine.low %v346, %v353
        %v369 = vcombine.low %v360, %v367
        %v371 = vunpack.c.l.s4 1966171168
        %v372 = vunpack.c.0.s8 %v371
        %v373 = vlaneseq
        %v374 = vshrl.u32 %v373, 7
        %v375 = vsub.s32 %v372, %v374
        %v376 = vrot.slane %v368, %v375
        %v378 = vunpack.c.l.s4 1966171168
        %v379 = vunpack.c.0.s8 %v378
        %v380 = vlaneseq
        %v381 = vshrl.u32 %v380, 7
        %v382 = vsub.s32 %v379, %v381
        %v383 = vrot.slane %v369, %v382
        %v384 = vcombine.low %v376, %v383
        %vm387 = vcmask 130048
        %388 = vst.msk [vmem:[#allocation4 + $0x3] sm:$0xff] %vm387, %v335
        %389 = vst.msk [vmem:[#allocation4 + $0xb] sm:$0xff] %vm387, %v384
        %v390 = vld [vmem:[#allocation3] sm:$0x3]
        %v392 = vrot.slane %v390, 1
        %393 = vrot.lane.b32.xlu0 %v390, 112
        %v394 = vpop.permute.xlu0 %393
        %v395 = vrot.slane %v394, 1
        %396 = vrot.lane.b32.xlu0 %v390, 96
        %v397 = vpop.permute.xlu0 %396
        %v398 = vrot.slane %v397, 1
        %399 = vrot.lane.b32.xlu0 %v390, 80
        %v400 = vpop.permute.xlu0 %399
        %v401 = vrot.slane %v400, 1
        %402 = vrot.lane.b32.xlu0 %v390, 64
        %v403 = vpop.permute.xlu0 %402
        %v404 = vrot.slane %v403, 1
        %405 = vrot.lane.b32.xlu0 %v390, 48
        %v406 = vpop.permute.xlu0 %405
        %v407 = vrot.slane %v406, 1
        %408 = vrot.lane.b32.xlu0 %v390, 32
        %v409 = vpop.permute.xlu0 %408
        %v410 = vrot.slane %v409, 1
        %411 = vrot.lane.b32.xlu0 %v390, 16
        %v412 = vpop.permute.xlu0 %411
        %v413 = vrot.slane %v412, 1
        %v414 = vcombine.low %v390, %v394
        %v415 = vcombine.low %v397, %v400
        %v416 = vcombine.low %v403, %v406
        %v417 = vcombine.low %v409, %v412
        %v419 = vunpack.c.l.s4 1966171168
        %v420 = vunpack.c.0.s8 %v419
        %v421 = vlaneseq
        %v422 = vshrl.u32 %v421, 7
        %v423 = vsub.s32 %v420, %v422
        %v424 = vrot.slane %v414, %v423
        %v426 = vunpack.c.l.s4 1966171168
        %v427 = vunpack.c.0.s8 %v426
        %v428 = vlaneseq
        %v429 = vshrl.u32 %v428, 7
        %v430 = vsub.s32 %v427, %v429
        %v431 = vrot.slane %v415, %v430
        %v433 = vunpack.c.l.s4 1966171168
        %v434 = vunpack.c.0.s8 %v433
        %v435 = vlaneseq
        %v436 = vshrl.u32 %v435, 7
        %v437 = vsub.s32 %v434, %v436
        %v438 = vrot.slane %v416, %v437
        %v440 = vunpack.c.l.s4 1966171168
        %v441 = vunpack.c.0.s8 %v440
        %v442 = vlaneseq
        %v443 = vshrl.u32 %v442, 7
        %v444 = vsub.s32 %v441, %v443
        %v445 = vrot.slane %v417, %v444
        %v446 = vcombine.low %v424, %v431
        %v447 = vcombine.low %v438, %v445
        %v449 = vunpack.c.l.s4 1966171168
        %v450 = vunpack.c.0.s8 %v449
        %v451 = vlaneseq
        %v452 = vshrl.u32 %v451, 7
        %v453 = vsub.s32 %v450, %v452
        %v454 = vrot.slane %v446, %v453
        %v456 = vunpack.c.l.s4 1966171168
        %v457 = vunpack.c.0.s8 %v456
        %v458 = vlaneseq
        %v459 = vshrl.u32 %v458, 7
        %v460 = vsub.s32 %v457, %v459
        %v461 = vrot.slane %v447, %v460
        %v462 = vcombine.low %v454, %v461
        %v463 = vcombine.low %v392, %v395
        %v464 = vcombine.low %v398, %v401
        %v465 = vcombine.low %v404, %v407
        %v466 = vcombine.low %v410, %v413
        %v468 = vunpack.c.l.s4 1966171168
        %v469 = vunpack.c.0.s8 %v468
        %v470 = vlaneseq
        %v471 = vshrl.u32 %v470, 7
        %v472 = vsub.s32 %v469, %v471
        %v473 = vrot.slane %v463, %v472
        %v475 = vunpack.c.l.s4 1966171168
        %v476 = vunpack.c.0.s8 %v475
        %v477 = vlaneseq
        %v478 = vshrl.u32 %v477, 7
        %v479 = vsub.s32 %v476, %v478
        %v480 = vrot.slane %v464, %v479
        %v482 = vunpack.c.l.s4 1966171168
        %v483 = vunpack.c.0.s8 %v482
        %v484 = vlaneseq
        %v485 = vshrl.u32 %v484, 7
        %v486 = vsub.s32 %v483, %v485
        %v487 = vrot.slane %v465, %v486
        %v489 = vunpack.c.l.s4 1966171168
        %v490 = vunpack.c.0.s8 %v489
        %v491 = vlaneseq
        %v492 = vshrl.u32 %v491, 7
        %v493 = vsub.s32 %v490, %v492
        %v494 = vrot.slane %v466, %v493
        %v495 = vcombine.low %v473, %v480
        %v496 = vcombine.low %v487, %v494
        %v498 = vunpack.c.l.s4 1966171168
        %v499 = vunpack.c.0.s8 %v498
        %v500 = vlaneseq
        %v501 = vshrl.u32 %v500, 7
        %v502 = vsub.s32 %v499, %v501
        %v503 = vrot.slane %v495, %v502
        %v505 = vunpack.c.l.s4 1966171168
        %v506 = vunpack.c.0.s8 %v505
        %v507 = vlaneseq
        %v508 = vshrl.u32 %v507, 7
        %v509 = vsub.s32 %v506, %v508
        %v510 = vrot.slane %v496, %v509
        %v511 = vcombine.low %v503, %v510
        %512 = vrot.lane.b32.xlu0 %v462, 16
        %v513 = vpop.permute.xlu0 %512
        %514 = vrot.lane.b32.xlu0 %v511, 16
        %v515 = vpop.permute.xlu0 %514
        %vm518 = vcmask 261248
        %519 = vst.msk [vmem:[#allocation4 + $0x3] sm:$0xff] %vm518, %v513
        %520 = vst.msk [vmem:[#allocation4 + $0xb] sm:$0xff] %vm518, %v515
        %v521 = vld [vmem:[#allocation4] sm:$0xff]
        %v522 = vld [vmem:[#allocation4 + $0x8] sm:$0xff]
        %v523 = vld [vmem:[#allocation4 + $0x10] sm:$0xff]
        %v524 = vld [vmem:[%s0] sm:$0xff]
        %v525 = vld [vmem:[%s0 + $0x8] sm:$0xff]
        %v526 = vld [vmem:[%s0 + $0x10] sm:$0xff]
        %v527 = vld [vmem:[%s0 + $0x18] sm:$0xff]
        %v528 = vld [vmem:[%s0 + $0x20] sm:$0xff]
        %v529 = vld [vmem:[%s0 + $0x28] sm:$0xff]
        %v530 = vld [vmem:[%s0 + $0x30] sm:$0xff]
        %v531 = vld [vmem:[%s0 + $0x38] sm:$0xff]
        %v532 = vld [vmem:[%s0 + $0x40] sm:$0xff]
        %v533 = vld [vmem:[%s0 + $0x48] sm:$0xff]
        %v534 = vld [vmem:[%s0 + $0x50] sm:$0xff]
        %v535 = vld [vmem:[%s0 + $0x58] sm:$0xff]
        %v536 = vld [vmem:[%s0 + $0x60] sm:$0xff]
        %v537 = vld [vmem:[%s0 + $0x68] sm:$0xff]
        %v538 = vld [vmem:[%s0 + $0x70] sm:$0xff]
        %v539 = vld [vmem:[%s0 + $0x78] sm:$0xff]
        %540 = vmatprep.subr.mxu0 0.0
        %541 = vmatpush1.msra.mxu0 %v539
        %542 = vmatprep.subr.mxu0 0.0
        %543 = vmatpush1.msra.mxu0 %v538
        %544 = vmatprep.subr.mxu0 0.0
        %545 = vmatpush1.msra.mxu0 %v537
        %546 = vmatprep.subr.mxu0 0.0
        %547 = vmatpush1.msra.mxu0 %v536
        %548 = vmatprep.subr.mxu0 0.0
        %549 = vmatpush1.msra.mxu0 %v535
        %550 = vmatprep.subr.mxu0 0.0
        %551 = vmatpush1.msra.mxu0 %v534
        %552 = vmatprep.subr.mxu0 0.0
        %553 = vmatpush1.msra.mxu0 %v533
        %554 = vmatprep.subr.mxu0 0.0
        %555 = vmatpush1.msra.mxu0 %v532
        %556 = vmatprep.subr.mxu0 0.0
        %557 = vmatpush1.msra.mxu0 %v531
        %558 = vmatprep.subr.mxu0 0.0
        %559 = vmatpush1.msra.mxu0 %v530
        %560 = vmatprep.subr.mxu0 0.0
        %561 = vmatpush1.msra.mxu0 %v529
        %562 = vmatprep.subr.mxu0 0.0
        %563 = vmatpush1.msra.mxu0 %v528
        %564 = vmatprep.subr.mxu0 0.0
        %565 = vmatpush1.msra.mxu0 %v527
        %566 = vmatprep.subr.mxu0 0.0
        %567 = vmatpush1.msra.mxu0 %v526
        %568 = vmatprep.subr.mxu0 0.0
        %569 = vmatpush1.msra.mxu0 %v525
        %570 = vmatprep.subr.mxu0 0.0
        %571 = vmatpush1.msra.mxu0 %v524
        %572 = vmatprep.subr.mxu0 0.0
        %573 = vmatpush2.msra.mxu0 0.0
        %574 = vmatprep.subr.mxu0 0.0
        %575 = vmatpush2.msra.mxu0 0.0
        %576 = vmatprep.subr.mxu0 0.0
        %577 = vmatpush2.msra.mxu0 0.0
        %578 = vmatprep.subr.mxu0 0.0
        %579 = vmatpush2.msra.mxu0 0.0
        %580 = vmatprep.subr.mxu0 0.0
        %581 = vmatpush2.msra.mxu0 0.0
        %582 = vmatprep.subr.mxu0 0.0
        %583 = vmatpush2.msra.mxu0 0.0
        %584 = vmatprep.subr.mxu0 0.0
        %585 = vmatpush2.msra.mxu0 0.0
        %586 = vmatprep.subr.mxu0 0.0
        %587 = vmatpush2.msra.mxu0 0.0
        %588 = vmatprep.subr.mxu0 0.0
        %589 = vmatpush2.msra.mxu0 0.0
        %590 = vmatprep.subr.mxu0 0.0
        %591 = vmatpush2.msra.mxu0 0.0
        %592 = vmatprep.subr.mxu0 0.0
        %593 = vmatpush2.msra.mxu0 0.0
        %594 = vmatprep.subr.mxu0 0.0
        %595 = vmatpush2.msra.mxu0 0.0
        %596 = vmatprep.subr.mxu0 0.0
        %597 = vmatpush2.msra.mxu0 0.0
        %598 = vmatprep.subr.mxu0 0.0
        %599 = vmatpush2.msra.mxu0 0.0
        %600 = vmatprep.subr.mxu0 0.0
        %601 = vmatpush2.msra.mxu0 0.0
        %602 = vmatprep.subr.mxu0 0.0
        %603 = vmatpush2.msra.mxu0 0.0
        %604 = vmatprep.mubr.f32.mxu0 0.0
        %605 = vmatmul.mubr.f32.gmra.mxu0 %v521
        %v606 = vpop.f32.mrf.mxu0
        %v607 = vadd.f32 0.0, %v606
        %v608 = vpop.f32.mrf.mxu0
        %609 = vmatprep.mubr.f32.mxu0 0.0
        %610 = vmatmul.mubr.f32.gmra.mxu0 %v522
        %v611 = vpop.f32.mrf.mxu0
        %v612 = vadd.f32 0.0, %v611
        %v613 = vpop.f32.mrf.mxu0
        %614 = vmatprep.mubr.f32.mxu0 0.0
        %615 = vmatmul.mubr.f32.gmra.mxu0 %v523
        %v616 = vpop.f32.mrf.mxu0
        %v617 = vadd.f32 0.0, %v616
        %v618 = vpop.f32.mrf.mxu0
        %619 = vdwg.mxu0
        %vm623 = vcmask 1046528
        %v624 = vrot.slane %v607, 1
        %v625 = vrot.slane %v612, 1
        %v626 = vsel %vm623, %v624, %v625
        %v627 = vrot.slane %v617, 1
        %v628 = vsel %vm623, %v625, %v627
        %629 = vrot.lane.b32.xlu0 %v626, 112
        %v630 = vpop.permute.xlu0 %629
        %631 = vrot.lane.b32.xlu0 %v628, 112
        %v632 = vpop.permute.xlu0 %631
        %v635 = vadd.f32 %v607, %v630
        %v636 = vadd.f32 %v612, %v632
        %vm637 = vcmask 1045504
        %v638 = vrot.slane %v607, 2
        %v639 = vrot.slane %v612, 2
        %v640 = vsel %vm637, %v638, %v639
        %v641 = vrot.slane %v617, 2
        %v642 = vsel %vm637, %v639, %v641
        %643 = vrot.lane.b32.xlu0 %v640, 96
        %v644 = vpop.permute.xlu0 %643
        %645 = vrot.lane.b32.xlu0 %v642, 96
        %v646 = vpop.permute.xlu0 %645
        %v649 = vadd.f32 %v635, %v644
        %v650 = vadd.f32 %v636, %v646
        %vm651 = vcmask 1044480
        %v652 = vrot.slane %v607, 3
        %v653 = vrot.slane %v612, 3
        %v654 = vsel %vm651, %v652, %v653
        %v655 = vrot.slane %v617, 3
        %v656 = vsel %vm651, %v653, %v655
        %657 = vrot.lane.b32.xlu0 %v654, 80
        %v658 = vpop.permute.xlu0 %657
        %659 = vrot.lane.b32.xlu0 %v656, 80
        %v660 = vpop.permute.xlu0 %659
        %v663 = vadd.f32 %v649, %v658
        %v664 = vadd.f32 %v650, %v660
        %v665 = vrot.slane %v607, 4
        %v666 = vrot.slane %v612, 4
        %v667 = vsel %vm183, %v665, %v666
        %v668 = vrot.slane %v617, 4
        %v669 = vsel %vm183, %v666, %v668
        %670 = vrot.lane.b32.xlu0 %v667, 64
        %v671 = vpop.permute.xlu0 %670
        %672 = vrot.lane.b32.xlu0 %v669, 64
        %v673 = vpop.permute.xlu0 %672
        %v676 = vadd.f32 %v663, %v671
        %v677 = vadd.f32 %v664, %v673
        %vm678 = vcmask 1042432
        %v679 = vrot.slane %v607, 5
        %v680 = vrot.slane %v612, 5
        %v681 = vsel %vm678, %v679, %v680
        %v682 = vrot.slane %v617, 5
        %v683 = vsel %vm678, %v680, %v682
        %684 = vrot.lane.b32.xlu0 %v681, 48
        %v685 = vpop.permute.xlu0 %684
        %686 = vrot.lane.b32.xlu0 %v683, 48
        %v687 = vpop.permute.xlu0 %686
        %v690 = vadd.f32 %v676, %v685
        %v691 = vadd.f32 %v677, %v687
        %vm692 = vcmask 1041408
        %v693 = vrot.slane %v607, 6
        %v694 = vrot.slane %v612, 6
        %v695 = vsel %vm692, %v693, %v694
        %v696 = vrot.slane %v617, 6
        %v697 = vsel %vm692, %v694, %v696
        %698 = vrot.lane.b32.xlu0 %v695, 32
        %v699 = vpop.permute.xlu0 %698
        %700 = vrot.lane.b32.xlu0 %v697, 32
        %v701 = vpop.permute.xlu0 %700
        %v704 = vadd.f32 %v690, %v699
        %v705 = vadd.f32 %v691, %v701
        %v706 = vcombine.high %v704, 0.0
        %v708 = vunpack.c.l.s4 1983009808
        %v709 = vunpack.c.0.s8 %v708
        %v710 = vlaneseq
        %v711 = vshrl.u32 %v710, 7
        %v712 = vsub.s32 %v709, %v711
        %v713 = vrot.slane %v704, %v712
        %v715 = vunpack.c.l.s4 1983009808
        %v716 = vunpack.c.0.s8 %v715
        %v717 = vlaneseq
        %v718 = vshrl.u32 %v717, 7
        %v719 = vsub.s32 %v716, %v718
        %v720 = vrot.slane %v706, %v719
        %v721 = vcombine.high %v713, 0.0
        %v723 = vunpack.c.l.s4 1934713408
        %v724 = vunpack.c.0.s8 %v723
        %v725 = vlaneseq
        %v726 = vshrl.u32 %v725, 7
        %v727 = vsub.s32 %v724, %v726
        %v728 = vrot.slane %v713, %v727
        %v730 = vunpack.c.l.s4 1934713408
        %v731 = vunpack.c.0.s8 %v730
        %v732 = vlaneseq
        %v733 = vshrl.u32 %v732, 7
        %v734 = vsub.s32 %v731, %v733
        %v735 = vrot.slane %v721, %v734
        %v736 = vcombine.high %v720, 0.0
        %v738 = vunpack.c.l.s4 1934713408
        %v739 = vunpack.c.0.s8 %v738
        %v740 = vlaneseq
        %v741 = vshrl.u32 %v740, 7
        %v742 = vsub.s32 %v739, %v741
        %v743 = vrot.slane %v720, %v742
        %v745 = vunpack.c.l.s4 1934713408
        %v746 = vunpack.c.0.s8 %v745
        %v747 = vlaneseq
        %v748 = vshrl.u32 %v747, 7
        %v749 = vsub.s32 %v746, %v748
        %v750 = vrot.slane %v736, %v749
        %v751 = vcombine.high %v728, 0.0
        %v752 = vcombine.high %v735, 0.0
        %v753 = vcombine.high %v743, 0.0
        %v754 = vcombine.high %v750, 0.0
        %v755 = vcombine.high %v705, 0.0
        %v757 = vunpack.c.l.s4 1983009808
        %v758 = vunpack.c.0.s8 %v757
        %v759 = vlaneseq
        %v760 = vshrl.u32 %v759, 7
        %v761 = vsub.s32 %v758, %v760
        %v762 = vrot.slane %v705, %v761
        %v764 = vunpack.c.l.s4 1983009808
        %v765 = vunpack.c.0.s8 %v764
        %v766 = vlaneseq
        %v767 = vshrl.u32 %v766, 7
        %v768 = vsub.s32 %v765, %v767
        %v769 = vrot.slane %v755, %v768
        %v770 = vcombine.high %v762, 0.0
        %v772 = vunpack.c.l.s4 1934713408
        %v773 = vunpack.c.0.s8 %v772
        %v774 = vlaneseq
        %v775 = vshrl.u32 %v774, 7
        %v776 = vsub.s32 %v773, %v775
        %v777 = vrot.slane %v762, %v776
        %v779 = vunpack.c.l.s4 1934713408
        %v780 = vunpack.c.0.s8 %v779
        %v781 = vlaneseq
        %v782 = vshrl.u32 %v781, 7
        %v783 = vsub.s32 %v780, %v782
        %v784 = vrot.slane %v770, %v783
        %v785 = vcombine.high %v769, 0.0
        %v787 = vunpack.c.l.s4 1934713408
        %v788 = vunpack.c.0.s8 %v787
        %v789 = vlaneseq
        %v790 = vshrl.u32 %v789, 7
        %v791 = vsub.s32 %v788, %v790
        %v792 = vrot.slane %v769, %v791
        %v794 = vunpack.c.l.s4 1934713408
        %v795 = vunpack.c.0.s8 %v794
        %v796 = vlaneseq
        %v797 = vshrl.u32 %v796, 7
        %v798 = vsub.s32 %v795, %v797
        %v799 = vrot.slane %v785, %v798
        %v800 = vcombine.high %v777, 0.0
        %v801 = vcombine.high %v784, 0.0
        %v802 = vcombine.high %v792, 0.0
        %v803 = vcombine.high %v799, 0.0
        %805 = vrot.lane.b32.xlu0 %v751, 16
        %v806 = vpop.permute.xlu0 %805
        %809 = vrot.lane.b32.xlu0 %v735, 32
        %v810 = vpop.permute.xlu0 %809
        %813 = vrot.lane.b32.xlu0 %v752, 48
        %v814 = vpop.permute.xlu0 %813
        %817 = vrot.lane.b32.xlu0 %v743, 64
        %v818 = vpop.permute.xlu0 %817
        %821 = vrot.lane.b32.xlu0 %v753, 80
        %v822 = vpop.permute.xlu0 %821
        %825 = vrot.lane.b32.xlu0 %v750, 96
        %v826 = vpop.permute.xlu0 %825
        %829 = vrot.lane.b32.xlu0 %v754, 112
        %v830 = vpop.permute.xlu0 %829
        %833 = vrot.lane.b32.xlu0 %v800, 16
        %v834 = vpop.permute.xlu0 %833
        %837 = vrot.lane.b32.xlu0 %v784, 32
        %v838 = vpop.permute.xlu0 %837
        %841 = vrot.lane.b32.xlu0 %v801, 48
        %v842 = vpop.permute.xlu0 %841
        %845 = vrot.lane.b32.xlu0 %v792, 64
        %v846 = vpop.permute.xlu0 %845
        %849 = vrot.lane.b32.xlu0 %v802, 80
        %v850 = vpop.permute.xlu0 %849
        %853 = vrot.lane.b32.xlu0 %v799, 96
        %v854 = vpop.permute.xlu0 %853
        %857 = vrot.lane.b32.xlu0 %v803, 112
        %v858 = vpop.permute.xlu0 %857
        %v860 = vsel %vm387, %v728, %v806
        %vm861 = vcmask 261120
        %v862 = vsel %vm861, %v860, %v810
        %vm863 = vcmask 392192
        %v864 = vsel %vm863, %v862, %v814
        %vm865 = vcmask 523264
        %v866 = vsel %vm865, %v864, %v818
        %vm867 = vcmask 654336
        %v868 = vsel %vm867, %v866, %v822
        %vm869 = vcmask 785408
        %v870 = vsel %vm869, %v868, %v826
        %vm871 = vcmask 916480
        %v872 = vsel %vm871, %v870, %v830
        %v873 = vsel %vm387, %v777, %v834
        %v874 = vsel %vm861, %v873, %v838
        %v875 = vsel %vm863, %v874, %v842
        %v876 = vsel %vm865, %v875, %v846
        %v877 = vsel %vm867, %v876, %v850
        %v878 = vsel %vm869, %v877, %v854
        %v879 = vsel %vm871, %v878, %v858
        %v880 = vxor.u32 %v872, 2147483648
        %v881 = vxor.u32 %v879, 2147483648
        %v882 = vmul.f32 %v880, 1.442695
        %v883 = vpow.pop %v882
        %v884 = vmul.f32 %v881, 1.442695
        %v885 = vpow.pop %v884
        %v886 = vadd.f32 %v883, 1.0
        %v887 = vadd.f32 %v885, 1.0
        %v888 = vrcp.pop %v886
        %v889 = vmul.f32 1.0, %v888
        %v890 = vrcp.pop %v887
        %v891 = vmul.f32 1.0, %v890
        %v894 = vcombine.low %v889, %v891
        %v896 = vunpack.c.l.s4 1966171168
        %v897 = vunpack.c.0.s8 %v896
        %v898 = vlaneseq
        %v899 = vshrl.u32 %v898, 7
        %v900 = vsub.s32 %v897, %v899
        %v901 = vrot.slane %v894, %v900
        %v903 = vunpack.c.l.s4 1966171168
        %v904 = vunpack.c.0.s8 %v903
        %v905 = vlaneseq
        %v906 = vshrl.u32 %v905, 7
        %v907 = vsub.s32 %v904, %v906
        %v908 = vrot.slane %v901, %v907
        %910 = vst.msk [vmem:[%s167] sm:$0x3] %vm220, %v908
      $region36: #{spatial_attention.1} parent=27 // pred_fallthru
        _
      %p911 = scmp.lt.s32.totalorder %s17, 1
      %s912 = scalar_select %p911, %s17, 1
      %s913 = smul.addr %s912, 2
      %s914 = scalar_lea.vmem %s2, %s913
      // Predicated region
      $region37: #{spatial_attention.1} parent=27 // pred_check
        %p915 = pneg %p92
      $region38: #{spatial_attention.1} parent=27 // pred_check_branch
        %917 = sbr.rel (%p915) target = $region40
      $region39: #{spatial_attention.1} parent=27 // pred_region
        _
      $region40: #{spatial_attention.1} parent=27 // pred_fallthru
        _
    $region28: #{spatial_attention.1} parent=5 // pred_fallthru
      _
    %p918 = scmp.le.s32.totalorder 2, %s8
    // Predicated region
    $region41: #{spatial_attention.1} parent=5 // pred_check
      %p919 = pneg %p918
    $region42: #{spatial_attention.1} parent=5 // pred_check_branch
      %921 = sbr.rel (%p919) target = $region44
    $region43: #{spatial_attention.1} parent=5 // pred_region
      %s922 = ssub.s32 %s8, 2
      // Predicated region
      $region45: #{spatial_attention.1} parent=43 // pred_check
        %p923 = pneg %p98
      $region46: #{spatial_attention.1} parent=43 // pred_check_branch
        %925 = sbr.rel (%p923) target = $region48
      $region47: #{spatial_attention.1} parent=43 // pred_region
        %p926 = scmp.lt.s32.totalorder %s19, 1
        %s927 = scalar_select %p926, %s19, 1
        %s928 = smul.addr %s927, 2
        %s929 = scalar_lea.vmem %s2, %s928
      $region48: #{spatial_attention.1} parent=43 // pred_fallthru
        _
    $region44: #{spatial_attention.1} parent=5 // pred_fallthru
      _
  $region6: #{spatial_attention.1} parent=0 // loop_footer
    %s12 = sadd.s32 1, %s8
  $region7: #{spatial_attention.1} parent=0 // loop_footer_branch
    %7 = sbr.rel target = $region3
  $region8: #{spatial_attention.1} parent=0 // loop_exit
    _

</llo_original>
